<compile_context>
chip_gen: v7x
topology: tpu7x:2x2x1
jax: 0.10.0
libtpu: 0.0.40
codegen_flags: <defaults>
</compile_context>

<pallas_src>
import jax
import jax.numpy as jnp
from jax.experimental import pallas as pl
from jax.experimental.pallas import tpu as pltpu


def soft_attention_kernel(a_ref, h_ref, wa_ref, wh_ref, bias_ref,
                          watt_ref, batt_ref, alpha_ref, z_ref):
    # a_ref    : (Bt, N, F)  pre-transposed features, batch tile on sublanes
    # h_ref    : (Bt, H)
    # wa_ref   : (F, O),  wh_ref : (H, O)
    # bias_ref : (1, O)   == b_a + b_h, pre-summed in the wrapper
    # watt_ref : (1, O),  batt_ref: (1, 1)
    # alpha_ref: (Bt, N), z_ref  : (Bt, F)
    Bt, N, F = a_ref.shape
    O = wa_ref.shape[1]

    a_nf = a_ref[...]                                   # (Bt, N, F)
    h = h_ref[...]                                      # (Bt, H)

    # Single flattened MXU matmul over the whole batch tile.
    # The (Bt, N, F) -> (Bt*N, F) flatten is a free view only when N is a
    # multiple of the f32 sublane count (8); it is still correct otherwise.
    # TODO(synk): pad N (with score masking) for shapes where N % 8 != 0 so the
    # flatten never forces a per-step VMEM relayout.
    att_a = jnp.dot(a_nf.reshape(Bt * N, F), wa_ref[...],
                    preferred_element_type=jnp.float32).reshape(Bt, N, O)
    att_h = jnp.dot(h, wh_ref[...],
                    preferred_element_type=jnp.float32)           # (Bt, O)

    s = jnp.maximum(att_a + att_h[:, None, :] + bias_ref[...], 0.0)  # (Bt,N,O) ReLU

    # f_att projection: VPU mul + lane reduce over O, scores stay (Bt, N).
    score = jnp.sum(s * watt_ref[...], axis=-1) + batt_ref[...]      # (Bt, N)

    # Softmax over num_feats (the lane axis).
    m = jnp.max(score, axis=-1, keepdims=True)                       # (Bt, 1)
    e = jnp.exp(score - m)                                           # (Bt, N)
    denom = jnp.sum(e, axis=-1, keepdims=True)                       # (Bt, 1)
    # Exact reciprocal keeps the 1e-5 test tolerance safe; flip to approx=True
    # once Bt*N grows past a vreg (it then rides the EUP slot for free).
    alpha = e * pl.reciprocal(denom, approx=False)                   # (Bt, N)
    alpha_ref[...] = alpha

    # z[b, f] = sum_n alpha[b, n] * a[b, n, f].  Output dim per (b, f) is 1, so
    # the MXU buys nothing here: VPU multiply + sublane reduce over N instead
    # of Bt one-row matmul pushes.
    z_ref[...] = jnp.sum(alpha[:, :, None] * a_nf, axis=1)           # (Bt, F)


def _device_kind():
    try:
        return jax.devices()[0].device_kind.lower()
    except Exception:
        return ""


def _vmem_policy():
    """Return (vmem_limit_bytes, need_two_parallel_steps) for this chip."""
    kind = _device_kind()
    if "v7" in kind:
        # v7x: 64 MiB VMEM per TensorCore but 2 TCs -> keep >= 2 parallel grid
        # steps so both cores get work, and leave headroom under the limit.
        return 48 * 1024 * 1024, True
    # v5e / v6e: 128 MiB VMEM, a single TensorCore -> one big step is best
    # (the extra grid step only costs ~0.35us of pipeline overhead).
    return 64 * 1024 * 1024, False


def _pick_batch_tile(B, N, F, *, need_two_steps, a_tile_budget_bytes):
    """Largest divisor of B whose a-tile fits the byte budget; on 2-TC chips
    keep >= 2 (preferably an even number of) grid steps."""
    per_batch = max(1, N * F * 4)                     # f32 bytes of one batch slab
    max_bt = max(1, a_tile_budget_bytes // per_batch)
    divisors = [bt for bt in range(1, B + 1) if B % bt == 0 and bt <= max_bt] or [1]
    if need_two_steps and B >= 2:
        multi = [bt for bt in divisors if B // bt >= 2]
        if multi:
            even = [bt for bt in multi if (B // bt) % 2 == 0]
            return max(even) if even else max(multi)
    return max(divisors)


def soft_attention(a, h, params, *, batch_tile=None, a_is_pretransposed=False):
    """a: (B, F, N) f32 (or (B, N, F) with a_is_pretransposed=True), h: (B, H).
    Returns (alpha (B, N), z (B, F))."""
    wa, ba, wh, bh, watt, batt = params
    if a_is_pretransposed:
        B, N, F = a.shape
        a_nf = a
    else:
        B, F, N = a.shape
        # One-time XLA-side transpose. For memory-bound production shapes have
        # the producer emit (B, N, F) and pass a_is_pretransposed=True instead;
        # this extra HBM pass over `a` is the main remaining cost on v5e.
        a_nf = jnp.transpose(a, (0, 2, 1))
    H = h.shape[1]
    O = wa.shape[1]

    vmem_limit, need_two_steps = _vmem_policy()
    if batch_tile is None:
        batch_tile = _pick_batch_tile(
            B, N, F, need_two_steps=need_two_steps,
            a_tile_budget_bytes=vmem_limit // 4)  # a-tile is double-buffered
    assert B % batch_tile == 0, "batch_tile must divide the batch size"
    G = B // batch_tile

    # Fold the batch tile into the sublane dimension of every block: the kernel
    # sees dense (Bt, ...) tiles, no size-1 middle dims, no in-kernel reshape.
    a4 = a_nf.reshape(G, batch_tile, N, F)
    h3 = h.reshape(G, batch_tile, H)
    bias2 = (ba + bh).reshape(1, O)          # the two biases only appear summed
    watt2 = watt.reshape(1, O)
    batt2 = batt.reshape(1, 1)

    const = lambda b: (0, 0)
    alpha3, z3 = pl.pallas_call(
        soft_attention_kernel,
        out_shape=(jax.ShapeDtypeStruct((G, batch_tile, N), jnp.float32),
                   jax.ShapeDtypeStruct((G, batch_tile, F), jnp.float32)),
        grid_spec=pltpu.PrefetchScalarGridSpec(
            num_scalar_prefetch=0,
            grid=(G,),
            in_specs=[
                pl.BlockSpec((None, batch_tile, N, F), lambda b: (b, 0, 0, 0)),  # a
                pl.BlockSpec((None, batch_tile, H), lambda b: (b, 0, 0)),        # h
                pl.BlockSpec((F, O), const),                                     # W_a
                pl.BlockSpec((H, O), const),                                     # W_h
                pl.BlockSpec((1, O), const),                                     # b_a+b_h
                pl.BlockSpec((1, O), const),                                     # w_att
                pl.BlockSpec((1, 1), const),                                     # b_att
            ],
            out_specs=[
                pl.BlockSpec((None, batch_tile, N), lambda b: (b, 0, 0)),        # alpha
                pl.BlockSpec((None, batch_tile, F), lambda b: (b, 0, 0)),        # z
            ],
        ),
        compiler_params=pltpu.CompilerParams(
            dimension_semantics=("parallel",),
            vmem_limit_bytes=vmem_limit,
        ),
    )(a4, h3, wa, wh, bias2, watt2, batt2)

    return alpha3.reshape(B, N), z3.reshape(B, F)


def reference(a, h, params):
    """Plain-JAX reference matching the PyTorch module semantics."""
    wa, ba, wh, bh, watt, batt = params
    B, F, N = a.shape
    a_t = jnp.transpose(a, (0, 2, 1))                    # (B, N, F)
    att_a = a_t.reshape(B * N, F) @ wa + ba              # (B*N, O)
    h_rep = jnp.repeat(h[:, None, :], N, axis=1)         # (B, N, H)
    att_h = h_rep.reshape(B * N, -1) @ wh + bh           # (B*N, O)
    s = jax.nn.relu(att_a + att_h)
    score = (s @ watt.reshape(-1, 1) + batt).reshape(B, N)
    alpha = jax.nn.softmax(score, axis=1)
    z = jnp.einsum('bfn,bn->bf', a, alpha)
    return alpha, z


if __name__ == "__main__":
    B, F_DIM, H_DIM, N = 2, 32, 16, 8          # batch, feat_dim, hidden_dim, num_feats
    O = min(F_DIM, H_DIM)                      # out_features of the attention MLP

    key = jax.random.PRNGKey(0)
    ks = jax.random.split(key, 8)
    a = jax.random.normal(ks[0], (B, F_DIM, N), dtype=jnp.float32)
    h = jax.random.normal(ks[1], (B, H_DIM), dtype=jnp.float32)

    # Deterministic parameter init (uniform, roughly matching nn.Linear scaling).
    def init_linear(kw, kb, fan_in, fan_out):
        bound = 1.0 / (fan_in ** 0.5)
        w = jax.random.uniform(kw, (fan_in, fan_out), jnp.float32, -bound, bound)
        b = jax.random.uniform(kb, (fan_out,), jnp.float32, -bound, bound)
        return w, b

    wa, ba = init_linear(ks[2], ks[3], F_DIM, O)
    wh, bh = init_linear(ks[4], ks[5], H_DIM, O)
    watt, batt = init_linear(ks[6], ks[7], O, 1)
    params = (wa, ba, wh, bh, watt.reshape(O), batt)

    alpha, z = soft_attention(a, h, params)
    jax.block_until_ready((alpha, z))

    alpha_ref, z_ref = reference(a, h, params)
    assert alpha.shape == (B, N) and z.shape == (B, F_DIM)
    assert jnp.allclose(alpha, alpha_ref, atol=1e-5, rtol=1e-5)
    assert jnp.allclose(z, z_ref, atol=1e-5, rtol=1e-5)

    print("KERNEL_OK")
</pallas_src>

<mosaic_0001>
module attributes {stable_mosaic.version = 11 : i64} {
  func.func @soft_attention_kernel(%arg0: i32, %arg1: memref<1x2x8x32xf32, #tpu.memory_space<vmem>>, %arg2: memref<1x2x16xf32, #tpu.memory_space<vmem>>, %arg3: memref<32x16xf32, #tpu.memory_space<vmem>>, %arg4: memref<16x16xf32, #tpu.memory_space<vmem>>, %arg5: memref<1x16xf32, #tpu.memory_space<vmem>>, %arg6: memref<1x16xf32, #tpu.memory_space<vmem>>, %arg7: memref<1x1xf32, #tpu.memory_space<vmem>>, %arg8: memref<1x2x8xf32, #tpu.memory_space<vmem>>, %arg9: memref<1x2x32xf32, #tpu.memory_space<vmem>>) attributes {dimension_semantics = [#tpu.dimension_semantics<parallel>], iteration_bounds = array<i64: 1>, scalar_prefetch = 0 : i64, scratch_operands = 0 : i64, tpu.core_type = #tpu.core_type<tc>, window_params = [{transform_indices = @transform_0, window_bounds = array<i64: 1, 2, 8, 32>}, {transform_indices = @transform_1, window_bounds = array<i64: 1, 2, 16>}, {pipeline_mode = #tpu.pipeline_mode<synchronous>, transform_indices = @transform_2, window_bounds = array<i64: 32, 16>}, {pipeline_mode = #tpu.pipeline_mode<synchronous>, transform_indices = @transform_3, window_bounds = array<i64: 16, 16>}, {pipeline_mode = #tpu.pipeline_mode<synchronous>, transform_indices = @transform_4, window_bounds = array<i64: 1, 16>}, {pipeline_mode = #tpu.pipeline_mode<synchronous>, transform_indices = @transform_5, window_bounds = array<i64: 1, 16>}, {pipeline_mode = #tpu.pipeline_mode<synchronous>, transform_indices = @transform_6, window_bounds = array<i64: 1, 1>}, {transform_indices = @transform_7, window_bounds = array<i64: 1, 2, 8>}, {transform_indices = @transform_8, window_bounds = array<i64: 1, 2, 32>}]} {
    %c0 = arith.constant 0 : index
    %c0_0 = arith.constant 0 : index
    %c0_1 = arith.constant 0 : index
    %c0_2 = arith.constant 0 : index
    %0 = vector.load %arg1[%c0, %c0_0, %c0_1, %c0_2] : memref<1x2x8x32xf32, #tpu.memory_space<vmem>>, vector<1x2x8x32xf32>
    %1 = vector.shape_cast %0 : vector<1x2x8x32xf32> to vector<2x8x32xf32>
    %c0_3 = arith.constant 0 : index
    %c0_4 = arith.constant 0 : index
    %c0_5 = arith.constant 0 : index
    %2 = vector.load %arg2[%c0_3, %c0_4, %c0_5] : memref<1x2x16xf32, #tpu.memory_space<vmem>>, vector<1x2x16xf32>
    %3 = vector.shape_cast %2 : vector<1x2x16xf32> to vector<2x16xf32>
    %4 = vector.shape_cast %1 : vector<2x8x32xf32> to vector<16x32xf32>
    %c0_6 = arith.constant 0 : index
    %c0_7 = arith.constant 0 : index
    %5 = vector.load %arg3[%c0_6, %c0_7] : memref<32x16xf32, #tpu.memory_space<vmem>>, vector<32x16xf32>
    %cst = arith.constant dense<0.000000e+00> : vector<16x16xf32>
    %6 = tpu.matmul %4, %5, %cst {dimension_numbers = #tpu.dot_dimension_numbers<[1], [0], [0], [1], [0, 0, 1, 1], [], []>} : vector<16x32xf32>, vector<32x16xf32>, vector<16x16xf32> -> vector<16x16xf32>
    %7 = vector.shape_cast %6 : vector<16x16xf32> to vector<2x8x16xf32>
    %c0_8 = arith.constant 0 : index
    %c0_9 = arith.constant 0 : index
    %8 = vector.load %arg4[%c0_8, %c0_9] : memref<16x16xf32, #tpu.memory_space<vmem>>, vector<16x16xf32>
    %cst_10 = arith.constant dense<0.000000e+00> : vector<2x16xf32>
    %9 = tpu.matmul %3, %8, %cst_10 {dimension_numbers = #tpu.dot_dimension_numbers<[1], [0], [0], [1], [0, 0, 1, 1], [], []>} : vector<2x16xf32>, vector<16x16xf32>, vector<2x16xf32> -> vector<2x16xf32>
    %10 = vector.shape_cast %9 : vector<2x16xf32> to vector<2x1x16xf32>
    %11 = vector.broadcast %10 : vector<2x1x16xf32> to vector<2x8x16xf32>
    %12 = arith.addf %7, %11 : vector<2x8x16xf32>
    %c0_11 = arith.constant 0 : index
    %c0_12 = arith.constant 0 : index
    %13 = vector.load %arg5[%c0_11, %c0_12] : memref<1x16xf32, #tpu.memory_space<vmem>>, vector<1x16xf32>
    %14 = vector.shape_cast %13 : vector<1x16xf32> to vector<1x1x16xf32>
    %15 = vector.broadcast %14 : vector<1x1x16xf32> to vector<2x8x16xf32>
    %16 = arith.addf %12, %15 : vector<2x8x16xf32>
    %cst_13 = arith.constant 0.000000e+00 : f32
    %17 = vector.broadcast %cst_13 : f32 to vector<2x8x16xf32>
    %18 = arith.maximumf %16, %17 : vector<2x8x16xf32>
    %c0_14 = arith.constant 0 : index
    %c0_15 = arith.constant 0 : index
    %19 = vector.load %arg6[%c0_14, %c0_15] : memref<1x16xf32, #tpu.memory_space<vmem>>, vector<1x16xf32>
    %20 = vector.shape_cast %19 : vector<1x16xf32> to vector<1x1x16xf32>
    %21 = vector.broadcast %20 : vector<1x1x16xf32> to vector<2x8x16xf32>
    %22 = arith.mulf %18, %21 : vector<2x8x16xf32>
    %cst_16 = arith.constant dense<0.000000e+00> : vector<2x8xf32>
    %23 = vector.multi_reduction <add>, %22, %cst_16 [2] : vector<2x8x16xf32> to vector<2x8xf32>
    %c0_17 = arith.constant 0 : index
    %c0_18 = arith.constant 0 : index
    %24 = vector.load %arg7[%c0_17, %c0_18] : memref<1x1xf32, #tpu.memory_space<vmem>>, vector<1x1xf32>
    %25 = vector.broadcast %24 : vector<1x1xf32> to vector<2x8xf32>
    %26 = arith.addf %23, %25 : vector<2x8xf32>
    %cst_19 = arith.constant dense<0xFF800000> : vector<2xf32>
    %27 = vector.multi_reduction <maximumf>, %26, %cst_19 [1] : vector<2x8xf32> to vector<2xf32>
    %28 = vector.shape_cast %27 : vector<2xf32> to vector<2x1xf32>
    %29 = vector.broadcast %28 : vector<2x1xf32> to vector<2x8xf32>
    %30 = arith.subf %26, %29 : vector<2x8xf32>
    %31 = math.exp %30 : vector<2x8xf32>
    %cst_20 = arith.constant dense<0.000000e+00> : vector<2xf32>
    %32 = vector.multi_reduction <add>, %31, %cst_20 [1] : vector<2x8xf32> to vector<2xf32>
    %33 = vector.shape_cast %32 : vector<2xf32> to vector<2x1xf32>
    %34 = tpu.reciprocal %33 : vector<2x1xf32> -> vector<2x1xf32>
    %35 = vector.broadcast %34 : vector<2x1xf32> to vector<2x8xf32>
    %36 = arith.mulf %31, %35 : vector<2x8xf32>
    %c0_21 = arith.constant 0 : index
    %c0_22 = arith.constant 0 : index
    %c0_23 = arith.constant 0 : index
    %37 = vector.load %arg8[%c0_21, %c0_22, %c0_23] : memref<1x2x8xf32, #tpu.memory_space<vmem>>, vector<1x2x8xf32>
    %38 = vector.shape_cast %37 : vector<1x2x8xf32> to vector<2x8xf32>
    %39 = vector.shape_cast %36 : vector<2x8xf32> to vector<1x2x8xf32>
    tpu.vector_store %arg8[%c0_21, %c0_22, %c0_23], %39 {strides = array<i32>} : memref<1x2x8xf32, #tpu.memory_space<vmem>>, vector<1x2x8xf32>,
    %40 = vector.shape_cast %36 : vector<2x8xf32> to vector<2x8x1xf32>
    %41 = vector.broadcast %40 : vector<2x8x1xf32> to vector<2x8x32xf32>
    %42 = arith.mulf %41, %1 : vector<2x8x32xf32>
    %cst_24 = arith.constant dense<0.000000e+00> : vector<2x32xf32>
    %43 = vector.multi_reduction <add>, %42, %cst_24 [1] : vector<2x8x32xf32> to vector<2x32xf32>
    %c0_25 = arith.constant 0 : index
    %c0_26 = arith.constant 0 : index
    %c0_27 = arith.constant 0 : index
    %44 = vector.load %arg9[%c0_25, %c0_26, %c0_27] : memref<1x2x32xf32, #tpu.memory_space<vmem>>, vector<1x2x32xf32>
    %45 = vector.shape_cast %44 : vector<1x2x32xf32> to vector<2x32xf32>
    %46 = vector.shape_cast %43 : vector<2x32xf32> to vector<1x2x32xf32>
    tpu.vector_store %arg9[%c0_25, %c0_26, %c0_27], %46 {strides = array<i32>} : memref<1x2x32xf32, #tpu.memory_space<vmem>>, vector<1x2x32xf32>,
    return
  }
  func.func @transform_0(%arg0: i32) -> (i32, i32, i32, i32) {
    %c0_i32 = arith.constant 0 : i32
    %c0_i32_0 = arith.constant 0 : i32
    %c0_i32_1 = arith.constant 0 : i32
    %c0_i32_2 = arith.constant 0 : i32
    return %arg0, %c0_i32, %c0_i32_0, %c0_i32_1 : i32, i32, i32, i32
  }
  func.func @transform_1(%arg0: i32) -> (i32, i32, i32) {
    %c0_i32 = arith.constant 0 : i32
    %c0_i32_0 = arith.constant 0 : i32
    %c0_i32_1 = arith.constant 0 : i32
    return %arg0, %c0_i32, %c0_i32_0 : i32, i32, i32
  }
  func.func @transform_2(%arg0: i32) -> (i32, i32) {
    %c0_i32 = arith.constant 0 : i32
    %c0_i32_0 = arith.constant 0 : i32
    %c0_i32_1 = arith.constant 0 : i32
    return %c0_i32, %c0_i32_0 : i32, i32
  }
  func.func @transform_3(%arg0: i32) -> (i32, i32) {
    %c0_i32 = arith.constant 0 : i32
    %c0_i32_0 = arith.constant 0 : i32
    %c0_i32_1 = arith.constant 0 : i32
    return %c0_i32, %c0_i32_0 : i32, i32
  }
  func.func @transform_4(%arg0: i32) -> (i32, i32) {
    %c0_i32 = arith.constant 0 : i32
    %c0_i32_0 = arith.constant 0 : i32
    %c0_i32_1 = arith.constant 0 : i32
    return %c0_i32, %c0_i32_0 : i32, i32
  }
  func.func @transform_5(%arg0: i32) -> (i32, i32) {
    %c0_i32 = arith.constant 0 : i32
    %c0_i32_0 = arith.constant 0 : i32
    %c0_i32_1 = arith.constant 0 : i32
    return %c0_i32, %c0_i32_0 : i32, i32
  }
  func.func @transform_6(%arg0: i32) -> (i32, i32) {
    %c0_i32 = arith.constant 0 : i32
    %c0_i32_0 = arith.constant 0 : i32
    %c0_i32_1 = arith.constant 0 : i32
    return %c0_i32, %c0_i32_0 : i32, i32
  }
  func.func @transform_7(%arg0: i32) -> (i32, i32, i32) {
    %c0_i32 = arith.constant 0 : i32
    %c0_i32_0 = arith.constant 0 : i32
    %c0_i32_1 = arith.constant 0 : i32
    return %arg0, %c0_i32, %c0_i32_0 : i32, i32, i32
  }
  func.func @transform_8(%arg0: i32) -> (i32, i32, i32) {
    %c0_i32 = arith.constant 0 : i32
    %c0_i32_0 = arith.constant 0 : i32
    %c0_i32_1 = arith.constant 0 : i32
    return %arg0, %c0_i32, %c0_i32_0 : i32, i32, i32
  }
}

</mosaic_0001>

<llo_original>
// kernel: tpu_custom_call.1
$region0: #{tpu_custom_call.1}
  #allocation0 [shape = 'u32[]', space=smem, size = 0x4, offset = 0x4, fixed_abs, tag = 'smem constant byte address 0x4 - core index']
  #allocation1 [shape = 'u32[144,128]{1,0:T(1,128)}', space=vmem, size = 0x12000, scoped, tag = 'internal scratch']
  #allocation2 [shape = 'f32[1,1]{1,0:T(1,128)S(1)}', space=vmem, size = 0x200, scoped, tag = 'scoped memory for tpu_custom_call.1']
  %s0 = inlined_call_operand.hbm [shape: f32[1,2,8,32], index: 0, kind: input, shape index: {}]
  %s1 = inlined_call_operand.hbm [shape: f32[1,2,16], index: 1, kind: input, shape index: {}]
  %s2 = inlined_call_operand.hbm [shape: f32[32,16], index: 2, kind: input, shape index: {}]
  %s3 = inlined_call_operand.hbm [shape: f32[16,16], index: 3, kind: input, shape index: {}]
  %s4 = inlined_call_operand.hbm [shape: f32[1,16], index: 4, kind: input, shape index: {}]
  %s5 = inlined_call_operand.hbm [shape: f32[1,16], index: 5, kind: input, shape index: {}]
  %s6 = inlined_call_operand.<no memory space> [shape: f32[1,1], index: 6, kind: input, shape index: {}]
  %s7 = inlined_call_operand.hbm [shape: f32[1,2,8], index: 7, kind: output, shape index: {0}]
  %s8 = inlined_call_operand.hbm [shape: f32[1,2,32], index: 8, kind: output, shape index: {1}]
  %9 = xla_tuple %s7, %s8
  %s10 = sld [smem:[#allocation0]]
  $region70: #{tpu_custom_call.1} parent=0
    _
  %s12 = ssub.s32 1, %s10
  %s13 = scalar_select 0, %s12, %s10
  %v14 = vstv %s6
  %15 = vst [vmem:[#allocation2] sm:$0x1] %v14
  $region1: #{tpu_custom_call.1} parent=0
    #allocation3 [shape = 'u8[8192]{0}', space=vmem, size = 0x2000, scoped, tag = 'input window, operand 0, single buffered']
    #allocation4 [shape = 's32[1]{0}', space=sflag, size = 0x4, scoped, tag = 'scoped memory for tpu_custom_call.1']
    #allocation5 [shape = 's32[1]{0}', space=sflag, size = 0x4, scoped, tag = 'scoped memory for tpu_custom_call.1']
    #allocation6 [shape = 'u8[1024]{0}', space=vmem, size = 0x400, scoped, tag = 'input window, operand 1, single buffered']
    #allocation7 [shape = 's32[1]{0}', space=sflag, size = 0x4, scoped, tag = 'scoped memory for tpu_custom_call.1']
    #allocation8 [shape = 'u8[16384]{0}', space=vmem, size = 0x4000, scoped, tag = 'input window, operand 2, single buffered']
    #allocation9 [shape = 'u8[8192]{0}', space=vmem, size = 0x2000, scoped, tag = 'input window, operand 3, single buffered']
    #allocation10 [shape = 's32[1]{0}', space=sflag, size = 0x4, scoped, tag = 'scoped memory for tpu_custom_call.1']
    #allocation11 [shape = 'u8[512]{0}', space=vmem, size = 0x400, scoped, tag = 'input window, operand 4, single buffered']
    #allocation12 [shape = 'u8[512]{0}', space=vmem, size = 0x400, scoped, tag = 'input window, operand 5, single buffered']
    #allocation13 [shape = 's32[1]{0}', space=sflag, size = 0x4, scoped, tag = 'scoped memory for tpu_custom_call.1']
    #allocation14 [shape = 'u8[1024]{0}', space=vmem, size = 0x400, scoped, tag = 'output window, operand 0, single buffered']
    #allocation15 [shape = 'u8[1024]{0}', space=vmem, size = 0x400, scoped, tag = 'output window, operand 1, single buffered']
    #allocation16 [shape = 's32[1]{0}', space=sflag, size = 0x4, scoped, tag = 'scoped memory for tpu_custom_call.1']
    %16 = vsyncpa [#allocation4], 0
    %17 = vsyncpa [#allocation7], 0
    %18 = vsyncpa [#allocation10], 0
    %19 = vsyncpa [#allocation13], 0
    %20 = vsyncpa [#allocation5], 0
    %21 = vsyncpa [#allocation16], 0
    // Predicated region
    $region2: #{tpu_custom_call.1} parent=1 // pred_check
      _
    $region3: #{tpu_custom_call.1} parent=1 // pred_check_branch
      %23 = sbr.rel (0) target = $region5
    $region4: #{tpu_custom_call.1} parent=1 // pred_region
      %s25 = ssub.s32 256, 256
      %26 = vsyncadd [#allocation4], %s25
      %s27 = sshll.u32 [#allocation3], 4
      %s28 = int_to_ptr.vmem [resolvable:$true] %s27
      %33 = dma.hbm_to_vmem [thread:$0]  %s0, 256, %s28, [#allocation4], 128, 128, 8
    $region5: #{tpu_custom_call.1} parent=1 // pred_fallthru
      _
    // Predicated region
    $region6: #{tpu_custom_call.1} parent=1 // pred_check
      _
    $region7: #{tpu_custom_call.1} parent=1 // pred_check_branch
      %35 = sbr.rel (0) target = $region9
    $region8: #{tpu_custom_call.1} parent=1 // pred_region
      %s37 = ssub.s32 32, 32
      %38 = vsyncadd [#allocation7], %s37
      %s40 = sshll.u32 [#allocation6], 4
      %s41 = int_to_ptr.vmem [resolvable:$true] %s40
      %43 = dma.hbm_to_vmem [thread:$0]  %s1, 32, %s41, [#allocation7]
    $region9: #{tpu_custom_call.1} parent=1 // pred_fallthru
      _
    // Predicated region
    $region10: #{tpu_custom_call.1} parent=1 // pred_check
      _
    $region11: #{tpu_custom_call.1} parent=1 // pred_check_branch
      %45 = sbr.rel (0) target = $region13
    $region12: #{tpu_custom_call.1} parent=1 // pred_region
      %s47 = ssub.s32 512, 512
      %48 = vsyncadd [#allocation7], %s47
      %s49 = sshll.u32 [#allocation8], 4
      %s50 = int_to_ptr.vmem [resolvable:$true] %s49
      %55 = dma.hbm_to_vmem [thread:$0]  %s2, 512, %s50, [#allocation7], 128, 128, 8
    $region13: #{tpu_custom_call.1} parent=1 // pred_fallthru
      _
    // Predicated region
    $region14: #{tpu_custom_call.1} parent=1 // pred_check
      _
    $region15: #{tpu_custom_call.1} parent=1 // pred_check_branch
      %57 = sbr.rel (0) target = $region17
    $region16: #{tpu_custom_call.1} parent=1 // pred_region
      %s59 = ssub.s32 256, 256
      %60 = vsyncadd [#allocation10], %s59
      %s61 = sshll.u32 [#allocation9], 4
      %s62 = int_to_ptr.vmem [resolvable:$true] %s61
      %67 = dma.hbm_to_vmem [thread:$0]  %s3, 256, %s62, [#allocation10], 128, 128, 8
    $region17: #{tpu_custom_call.1} parent=1 // pred_fallthru
      _
    // Predicated region
    $region18: #{tpu_custom_call.1} parent=1 // pred_check
      _
    $region19: #{tpu_custom_call.1} parent=1 // pred_check_branch
      %69 = sbr.rel (0) target = $region21
    $region20: #{tpu_custom_call.1} parent=1 // pred_region
      %s71 = ssub.s32 16, 16
      %72 = vsyncadd [#allocation10], %s71
      %s74 = sshll.u32 [#allocation11], 4
      %s75 = int_to_ptr.vmem [resolvable:$true] %s74
      %77 = dma.hbm_to_vmem [thread:$0]  %s4, 16, %s75, [#allocation10]
    $region21: #{tpu_custom_call.1} parent=1 // pred_fallthru
      _
    // Predicated region
    $region22: #{tpu_custom_call.1} parent=1 // pred_check
      _
    $region23: #{tpu_custom_call.1} parent=1 // pred_check_branch
      %79 = sbr.rel (0) target = $region25
    $region24: #{tpu_custom_call.1} parent=1 // pred_region
      %s81 = ssub.s32 16, 16
      %82 = vsyncadd [#allocation13], %s81
      %s84 = sshll.u32 [#allocation12], 4
      %s85 = int_to_ptr.vmem [resolvable:$true] %s84
      %87 = dma.hbm_to_vmem [thread:$0]  %s5, 16, %s85, [#allocation13]
    $region25: #{tpu_custom_call.1} parent=1 // pred_fallthru
      _
    // Predicated region
    $region26: #{tpu_custom_call.1} parent=1 // pred_check
      _
    $region27: #{tpu_custom_call.1} parent=1 // pred_check_branch
      %89 = sbr.rel (0) target = $region29
    $region28: #{tpu_custom_call.1} parent=1 // pred_region
      _
    $region29: #{tpu_custom_call.1} parent=1 // pred_fallthru
      _
    // Predicated region
    $region30: #{tpu_custom_call.1} parent=1 // pred_check
      _
    $region31: #{tpu_custom_call.1} parent=1 // pred_check_branch
      %91 = sbr.rel (0) target = $region33
    $region32: #{tpu_custom_call.1} parent=1 // pred_region
      %92 = dma.done [#allocation4], 256
    $region33: #{tpu_custom_call.1} parent=1 // pred_fallthru
      _
    // Predicated region
    $region34: #{tpu_custom_call.1} parent=1 // pred_check
      _
    $region35: #{tpu_custom_call.1} parent=1 // pred_check_branch
      %94 = sbr.rel (0) target = $region37
    $region36: #{tpu_custom_call.1} parent=1 // pred_region
      %95 = dma.done [#allocation7], 32
    $region37: #{tpu_custom_call.1} parent=1 // pred_fallthru
      _
    // Predicated region
    $region38: #{tpu_custom_call.1} parent=1 // pred_check
      _
    $region39: #{tpu_custom_call.1} parent=1 // pred_check_branch
      %97 = sbr.rel (0) target = $region41
    $region40: #{tpu_custom_call.1} parent=1 // pred_region
      %98 = dma.done [#allocation7], 512
    $region41: #{tpu_custom_call.1} parent=1 // pred_fallthru
      _
    // Predicated region
    $region42: #{tpu_custom_call.1} parent=1 // pred_check
      _
    $region43: #{tpu_custom_call.1} parent=1 // pred_check_branch
      %100 = sbr.rel (0) target = $region45
    $region44: #{tpu_custom_call.1} parent=1 // pred_region
      %101 = dma.done [#allocation10], 256
    $region45: #{tpu_custom_call.1} parent=1 // pred_fallthru
      _
    // Predicated region
    $region46: #{tpu_custom_call.1} parent=1 // pred_check
      _
    $region47: #{tpu_custom_call.1} parent=1 // pred_check_branch
      %103 = sbr.rel (0) target = $region49
    $region48: #{tpu_custom_call.1} parent=1 // pred_region
      %104 = dma.done [#allocation10], 16
    $region49: #{tpu_custom_call.1} parent=1 // pred_fallthru
      _
    // Predicated region
    $region50: #{tpu_custom_call.1} parent=1 // pred_check
      _
    $region51: #{tpu_custom_call.1} parent=1 // pred_check_branch
      %106 = sbr.rel (0) target = $region53
    $region52: #{tpu_custom_call.1} parent=1 // pred_region
      %107 = dma.done [#allocation13], 16
    $region53: #{tpu_custom_call.1} parent=1 // pred_fallthru
      _
    %v108 = vld [vmem:[#allocation3] sm:$0xff]
    %v109 = vld [vmem:[#allocation3 + $0x8] sm:$0xff]
    %v110 = vld [vmem:[#allocation6] sm:$0x3]
    %v111 = vld [vmem:[#allocation8] sm:$0xff]
    %v112 = vld [vmem:[#allocation8 + $0x8] sm:$0xff]
    %v113 = vld [vmem:[#allocation8 + $0x10] sm:$0xff]
    %v114 = vld [vmem:[#allocation8 + $0x18] sm:$0xff]
    %vm115 = vcmask 261120
    %v117 = vsel %vm115, %v108, 0
    %v120 = vsel %vm115, %v109, 0
    %122 = vmatprep.subr.mxu0 0.0
    %123 = vmatpush1.msra.mxu0 %v111
    %124 = vmatprep.subr.mxu0 0.0
    %125 = vmatpush1.msra.mxu0 %v112
    %126 = vmatprep.subr.mxu0 0.0
    %127 = vmatpush1.msra.mxu0 %v113
    %128 = vmatprep.subr.mxu0 0.0
    %129 = vmatpush1.msra.mxu0 %v114
    %130 = vmatprep.subr.mxu0 0.0
    %131 = vmatpush1.msra.mxu0 0.0
    %132 = vmatprep.subr.mxu0 0.0
    %133 = vmatpush1.msra.mxu0 0.0
    %134 = vmatprep.subr.mxu0 0.0
    %135 = vmatpush1.msra.mxu0 0.0
    %136 = vmatprep.subr.mxu0 0.0
    %137 = vmatpush1.msra.mxu0 0.0
    %138 = vmatprep.subr.mxu0 0.0
    %139 = vmatpush1.msra.mxu0 0.0
    %140 = vmatprep.subr.mxu0 0.0
    %141 = vmatpush1.msra.mxu0 0.0
    %142 = vmatprep.subr.mxu0 0.0
    %143 = vmatpush1.msra.mxu0 0.0
    %144 = vmatprep.subr.mxu0 0.0
    %145 = vmatpush1.msra.mxu0 0.0
    %146 = vmatprep.subr.mxu0 0.0
    %147 = vmatpush1.msra.mxu0 0.0
    %148 = vmatprep.subr.mxu0 0.0
    %149 = vmatpush1.msra.mxu0 0.0
    %150 = vmatprep.subr.mxu0 0.0
    %151 = vmatpush1.msra.mxu0 0.0
    %152 = vmatprep.subr.mxu0 0.0
    %153 = vmatpush1.msra.mxu0 0.0
    %154 = vmatprep.subr.mxu0 0.0
    %155 = vmatpush1.msra.mxu0 0.0
    %156 = vmatprep.subr.mxu0 0.0
    %157 = vmatpush1.msra.mxu0 0.0
    %158 = vmatprep.subr.mxu0 0.0
    %159 = vmatpush1.msra.mxu0 0.0
    %160 = vmatprep.subr.mxu0 0.0
    %161 = vmatpush1.msra.mxu0 0.0
    %162 = vmatprep.subr.mxu0 0.0
    %163 = vmatpush1.msra.mxu0 0.0
    %164 = vmatprep.subr.mxu0 0.0
    %165 = vmatpush1.msra.mxu0 0.0
    %166 = vmatprep.subr.mxu0 0.0
    %167 = vmatpush1.msra.mxu0 0.0
    %168 = vmatprep.subr.mxu0 0.0
    %169 = vmatpush1.msra.mxu0 0.0
    %170 = vmatprep.subr.mxu0 0.0
    %171 = vmatpush1.msra.mxu0 0.0
    %172 = vmatprep.subr.mxu0 0.0
    %173 = vmatpush1.msra.mxu0 0.0
    %174 = vmatprep.subr.mxu0 0.0
    %175 = vmatpush1.msra.mxu0 0.0
    %176 = vmatprep.subr.mxu0 0.0
    %177 = vmatpush1.msra.mxu0 0.0
    %178 = vmatprep.subr.mxu0 0.0
    %179 = vmatpush1.msra.mxu0 0.0
    %180 = vmatprep.subr.mxu0 0.0
    %181 = vmatpush1.msra.mxu0 0.0
    %182 = vmatprep.subr.mxu0 0.0
    %183 = vmatpush1.msra.mxu0 0.0
    %184 = vmatprep.subr.mxu0 0.0
    %185 = vmatpush1.msra.mxu0 0.0
    %186 = vmatprep.mubr.f32.mxu0 0.0
    %187 = vmatmul.mubr.f32.gmra.mrb[0].mxu0 %v117
    %v188 = vpop.f32.mrb[0].mxu0
    %v189 = vadd.f32 0.0, %v188
    %v190 = vpop.f32.mrb[0].mxu0
    %191 = vmatprep.mubr.f32.mxu0 0.0
    %192 = vmatmul.mubr.f32.gmra.mrb[0].mxu0 %v120
    %v193 = vpop.f32.mrb[0].mxu0
    %v194 = vadd.f32 0.0, %v193
    %v195 = vpop.f32.mrb[0].mxu0
    %196 = vdwg.mxu0
    %v197 = vld [vmem:[#allocation9] sm:$0xff]
    %v198 = vld [vmem:[#allocation9 + $0x8] sm:$0xff]
    %vm199 = vcmask 130048
    %v201 = vsel %vm199, %v110, 0
    %203 = vmatprep.subr.mxu0 0.0
    %204 = vmatpush1.msra.mxu0 %v197
    %205 = vmatprep.subr.mxu0 0.0
    %206 = vmatpush1.msra.mxu0 %v198
    %207 = vmatprep.subr.mxu0 0.0
    %208 = vmatpush1.msra.mxu0 0.0
    %209 = vmatprep.subr.mxu0 0.0
    %210 = vmatpush1.msra.mxu0 0.0
    %211 = vmatprep.subr.mxu0 0.0
    %212 = vmatpush1.msra.mxu0 0.0
    %213 = vmatprep.subr.mxu0 0.0
    %214 = vmatpush1.msra.mxu0 0.0
    %215 = vmatprep.subr.mxu0 0.0
    %216 = vmatpush1.msra.mxu0 0.0
    %217 = vmatprep.subr.mxu0 0.0
    %218 = vmatpush1.msra.mxu0 0.0
    %219 = vmatprep.subr.mxu0 0.0
    %220 = vmatpush1.msra.mxu0 0.0
    %221 = vmatprep.subr.mxu0 0.0
    %222 = vmatpush1.msra.mxu0 0.0
    %223 = vmatprep.subr.mxu0 0.0
    %224 = vmatpush1.msra.mxu0 0.0
    %225 = vmatprep.subr.mxu0 0.0
    %226 = vmatpush1.msra.mxu0 0.0
    %227 = vmatprep.subr.mxu0 0.0
    %228 = vmatpush1.msra.mxu0 0.0
    %229 = vmatprep.subr.mxu0 0.0
    %230 = vmatpush1.msra.mxu0 0.0
    %231 = vmatprep.subr.mxu0 0.0
    %232 = vmatpush1.msra.mxu0 0.0
    %233 = vmatprep.subr.mxu0 0.0
    %234 = vmatpush1.msra.mxu0 0.0
    %235 = vmatprep.subr.mxu0 0.0
    %236 = vmatpush1.msra.mxu0 0.0
    %237 = vmatprep.subr.mxu0 0.0
    %238 = vmatpush1.msra.mxu0 0.0
    %239 = vmatprep.subr.mxu0 0.0
    %240 = vmatpush1.msra.mxu0 0.0
    %241 = vmatprep.subr.mxu0 0.0
    %242 = vmatpush1.msra.mxu0 0.0
    %243 = vmatprep.subr.mxu0 0.0
    %244 = vmatpush1.msra.mxu0 0.0
    %245 = vmatprep.subr.mxu0 0.0
    %246 = vmatpush1.msra.mxu0 0.0
    %247 = vmatprep.subr.mxu0 0.0
    %248 = vmatpush1.msra.mxu0 0.0
    %249 = vmatprep.subr.mxu0 0.0
    %250 = vmatpush1.msra.mxu0 0.0
    %251 = vmatprep.subr.mxu0 0.0
    %252 = vmatpush1.msra.mxu0 0.0
    %253 = vmatprep.subr.mxu0 0.0
    %254 = vmatpush1.msra.mxu0 0.0
    %255 = vmatprep.subr.mxu0 0.0
    %256 = vmatpush1.msra.mxu0 0.0
    %257 = vmatprep.subr.mxu0 0.0
    %258 = vmatpush1.msra.mxu0 0.0
    %259 = vmatprep.subr.mxu0 0.0
    %260 = vmatpush1.msra.mxu0 0.0
    %261 = vmatprep.subr.mxu0 0.0
    %262 = vmatpush1.msra.mxu0 0.0
    %263 = vmatprep.subr.mxu0 0.0
    %264 = vmatpush1.msra.mxu0 0.0
    %265 = vmatprep.subr.mxu0 0.0
    %266 = vmatpush1.msra.mxu0 0.0
    %267 = vmatprep.mubr.f32.mxu0 0.0
    %268 = vmatmul.mubr.f32.gmra.mrb[0].mxu0 %v201
    %v269 = vpop.f32.mrb[0].mxu0
    %v270 = vadd.f32 0.0, %v269
    %v271 = vpop.f32.mrb[0].mxu0
    %272 = vdwg.mxu0
    %v275 = vunpack.c.l.s4 1966171168
    %v276 = vunpack.c.0.s8 %v275
    %v277 = vlaneseq
    %v278 = vshrl.u32 %v277, 7
    %v279 = vsub.s32 %v276, %v278
    %v280 = vrot.slane %v270, %v279
    %v281 = vcombine.high %v280, %v280
    %v283 = vunpack.c.l.s4 1966171168
    %v284 = vunpack.c.0.s8 %v283
    %v285 = vlaneseq
    %v286 = vshrl.u32 %v285, 7
    %v287 = vsub.s32 %v284, %v286
    %v288 = vrot.slane %v280, %v287
    %v290 = vunpack.c.l.s4 1966171168
    %v291 = vunpack.c.0.s8 %v290
    %v292 = vlaneseq
    %v293 = vshrl.u32 %v292, 7
    %v294 = vsub.s32 %v291, %v293
    %v295 = vrot.slane %v281, %v294
    %v296 = vlaneseq
    %v297 = vshrl.u32 %v296, 7
    %v298 = vsub.s32 0, %v297
    %v299 = vrot.slane %v288, %v298
    %v300 = vlaneseq
    %v301 = vshrl.u32 %v300, 7
    %v302 = vsub.s32 0, %v301
    %v303 = vrot.slane %v295, %v302
    %v306 = vadd.f32 %v189, %v299
    %v307 = vadd.f32 %v194, %v303
    %v308 = vld [vmem:[#allocation11] sm:$0x1]
    %v310 = vlaneseq
    %v311 = vshrl.u32 %v310, 7
    %v312 = vsub.s32 0, %v311
    %v313 = vrot.slane %v308, %v312
    %v315 = vadd.f32 %v306, %v313
    %v316 = vadd.f32 %v307, %v313
    %v317 = vmax.f32 %v315, 0.0
    %v318 = vmax.f32 %v316, 0.0
    %v319 = vld [vmem:[#allocation12] sm:$0x1]
    %v321 = vlaneseq
    %v322 = vshrl.u32 %v321, 7
    %v323 = vsub.s32 0, %v322
    %v324 = vrot.slane %v319, %v323
    %v326 = vmul.f32 %v317, %v324
    %v327 = vmul.f32 %v318, %v324
    %v328 = vsel %vm199, %v326, 0.0
    %329 = vadd.xlane.f32.xlu0 %v328
    %v330 = vpop.xlane.xlu0 %329
    %v331 = vsel %vm199, %v327, 0.0
    %332 = vadd.xlane.f32.xlu0 %v331
    %v333 = vpop.xlane.xlu0 %332
    %v334 = vld [vmem:[#allocation2] sm:$0x1]
    %v336 = vlaneseq
    %v337 = vshrl.u32 %v336, 7
    %v338 = vsub.s32 0, %v337
    %v339 = vrot.slane %v334, %v338
    %340 = vset.pattern.permute.xlu0 0
    %341 = vperm.xlu0 %340, %v339
    %v342 = vpop.permute.xlu0 %341
    %v344 = vadd.f32 %v330, %v342
    %v345 = vadd.f32 %v333, %v342
    %v348 = vlaneseq
    %v349 = vand.u32 %v348, 127
    %v350 = vlaneseq
    %v351 = vshrl.u32 %v350, 7
    %v352 = vsub.s32 %v349, %v351
    %v353 = vrot.slane %v344, %v352
    %v354 = vlaneseq
    %v355 = vshrl.u32 %v354, 7
    %v356 = vsub.s32 %v349, %v355
    %v357 = vrot.slane %v345, %v356
    %vm358 = vcmask 1041409
    %v359 = vsel %vm358, %v357, %v353
    %vm361 = vcmask 58368
    %v362 = vsel %vm361, %v359, -inf
    %363 = vmax.xlane.f32.xlu0 %v362
    %v364 = vpop.xlane.xlu0 %363
    %v366 = vlaneseq
    %v367 = vshrl.u32 %v366, 7
    %v368 = vsub.s32 0, %v367
    %v369 = vrot.slane %v364, %v368
    %v370 = vlaneseq
    %v371 = vshrl.u32 %v370, 7
    %v372 = vsub.s32 1, %v371
    %v373 = vrot.slane %v364, %v372
    %v376 = vsub.f32 %v344, %v369
    %v377 = vsub.f32 %v345, %v373
    %v378 = vmul.f32 %v376, 1.442695
    %v379 = vpow.pop %v378
    %v380 = vmul.f32 %v377, 1.442695
    %v381 = vpow.pop %v380
    %384 = vset.pattern.permute.xlu0 0
    %385 = vperm.xlu0 %384, %v379
    %v386 = vpop.permute.xlu0 %385
    %387 = vset.pattern.permute.xlu0 0
    %388 = vperm.xlu0 %387, %v381
    %v389 = vpop.permute.xlu0 %388
    %v390 = vlaneseq
    %v391 = vshrl.u32 %v390, 7
    %v392 = vsub.s32 %v349, %v391
    %v393 = vrot.slane %v386, %v392
    %v394 = vlaneseq
    %v395 = vshrl.u32 %v394, 7
    %v396 = vsub.s32 %v349, %v395
    %v397 = vrot.slane %v389, %v396
    %v398 = vsel %vm358, %v397, %v393
    %v400 = vsel %vm361, %v398, 0.0
    %401 = vadd.xlane.f32.xlu0 %v400
    %v402 = vpop.xlane.xlu0 %401
    %v403 = vrcp.pop %v402
    %v405 = vlaneseq
    %v406 = vshrl.u32 %v405, 7
    %v407 = vsub.s32 0, %v406
    %v408 = vrot.slane %v403, %v407
    %v409 = vlaneseq
    %v410 = vshrl.u32 %v409, 7
    %v411 = vsub.s32 1, %v410
    %v412 = vrot.slane %v403, %v411
    %v415 = vmul.f32 %v379, %v408
    %v416 = vmul.f32 %v381, %v412
    %419 = vset.pattern.permute.xlu0 0
    %420 = vperm.xlu0 %419, %v415
    %v421 = vpop.permute.xlu0 %420
    %422 = vset.pattern.permute.xlu0 0
    %423 = vperm.xlu0 %422, %v416
    %v424 = vpop.permute.xlu0 %423
    %v425 = vlaneseq
    %v426 = vshrl.u32 %v425, 7
    %v427 = vsub.s32 %v349, %v426
    %v428 = vrot.slane %v421, %v427
    %v429 = vlaneseq
    %v430 = vshrl.u32 %v429, 7
    %v431 = vsub.s32 %v349, %v430
    %v432 = vrot.slane %v424, %v431
    %v433 = vsel %vm358, %v432, %v428
    %435 = vst.msk [vmem:[#allocation14] sm:$0x3] %vm361, %v433
    %v438 = vmul.f32 %v421, %v108
    %v439 = vmul.f32 %v424, %v109
    %v440 = vsel %vm115, %v438, 0.0
    %v441 = vrot.slane %v440, 4
    %v442 = vadd.f32 %v440, %v441
    %v443 = vrot.slane %v442, 2
    %v444 = vadd.f32 %v442, %v443
    %v445 = vrot.slane %v444, 1
    %v446 = vadd.f32 %v444, %v445
    %v447 = vsel %vm115, %v439, 0.0
    %v448 = vrot.slane %v447, 4
    %v449 = vadd.f32 %v447, %v448
    %v450 = vrot.slane %v449, 2
    %v451 = vadd.f32 %v449, %v450
    %v452 = vrot.slane %v451, 1
    %v453 = vadd.f32 %v451, %v452
    %v456 = vsel %vm358, %v453, %v446
    %vm458 = vcmask 254976
    %459 = vst.msk [vmem:[#allocation15] sm:$0x3] %vm458, %v456
    // Predicated region
    $region54: #{tpu_custom_call.1} parent=1 // pred_check
      _
    $region55: #{tpu_custom_call.1} parent=1 // pred_check_branch
      %461 = sbr.rel (0) target = $region57
    $region56: #{tpu_custom_call.1} parent=1 // pred_region
      %s463 = ssub.s32 32, 32
      %464 = vsyncadd [#allocation5], %s463
      %s466 = sshll.u32 [#allocation14], 4
      %s467 = int_to_ptr.vmem [resolvable:$true] %s466
      %469 = dma.vmem_to_hbm [thread:$0]  %s467, 32, %s7, [#allocation5]
    $region57: #{tpu_custom_call.1} parent=1 // pred_fallthru
      _
    // Predicated region
    $region58: #{tpu_custom_call.1} parent=1 // pred_check
      _
    $region59: #{tpu_custom_call.1} parent=1 // pred_check_branch
      %471 = sbr.rel (0) target = $region61
    $region60: #{tpu_custom_call.1} parent=1 // pred_region
      %s473 = ssub.s32 32, 32
      %474 = vsyncadd [#allocation16], %s473
      %s476 = sshll.u32 [#allocation15], 4
      %s477 = int_to_ptr.vmem [resolvable:$true] %s476
      %479 = dma.vmem_to_hbm [thread:$0]  %s477, 32, %s8, [#allocation16]
    $region61: #{tpu_custom_call.1} parent=1 // pred_fallthru
      _
    // Predicated region
    $region62: #{tpu_custom_call.1} parent=1 // pred_check
      _
    $region63: #{tpu_custom_call.1} parent=1 // pred_check_branch
      %481 = sbr.rel (0) target = $region65
    $region64: #{tpu_custom_call.1} parent=1 // pred_region
      %482 = dma.done [#allocation5], 32
    $region65: #{tpu_custom_call.1} parent=1 // pred_fallthru
      _
    // Predicated region
    $region66: #{tpu_custom_call.1} parent=1 // pred_check
      _
    $region67: #{tpu_custom_call.1} parent=1 // pred_check_branch
      %484 = sbr.rel (0) target = $region69
    $region68: #{tpu_custom_call.1} parent=1 // pred_region
      %485 = dma.done [#allocation16], 32
    $region69: #{tpu_custom_call.1} parent=1 // pred_fallthru
      _
    %486 = vsyncpa [#allocation4], 1
    %487 = vsyncpa [#allocation7], 1
    %488 = vsyncpa [#allocation10], 1
    %489 = vsyncpa [#allocation13], 1
    %490 = vsyncpa [#allocation5], 1
    %491 = vsyncpa [#allocation16], 1

</llo_original>
